<compile_context>
chip_gen: v7x
topology: tpu7x:2x2x1
jax: 0.10.0
libtpu: 0.0.40
codegen_flags: <defaults>
</compile_context>

<pallas_src>
import jax
import jax.numpy as jnp
from jax.experimental import pallas as pl
from jax.experimental.pallas import tpu as pltpu


def _round_up(x, m):
    return (x + m - 1) // m * m


def _vmem_capacity_bytes():
    # v5e/v6e: 128 MiB VMEM per TensorCore, v7x: 64 MiB. Fall back conservatively.
    try:
        return int(pltpu.get_tpu_info().vmem_capacity_bytes)
    except Exception:
        return 64 * 1024 * 1024


# Scoped VMEM limit we request: <= physical on every generation (raises v5e's 16 MiB default).
_VMEM_LIMIT_BYTES = 32 * 1024 * 1024


# ----------------------------- kernels ---------------------------------------


def _dense_kernel(x_ref, w_ref, b_ref, o_ref):
    # x_ref: (TM, K), w_ref: (K, TN), b_ref: (1, TN), o_ref: (TM, TN)
    acc = jnp.dot(x_ref[...], w_ref[...], preferred_element_type=jnp.float32)
    o_ref[...] = (acc + b_ref[...]).astype(o_ref.dtype)


def _grouped_kernel(x_ref, w_ref, b_ref, o_ref):
    # x_ref: (TB, G*Cin), w_ref: (G, Cin, Coutp), b_ref: (G, 1, Coutp),
    # o_ref: (TB, G*Coutp).  Coutp is a multiple of 128, so every per-group
    # store below is a full-lane (unmasked) store.
    G, Cin, Coutp = w_ref.shape
    x = x_ref[...]
    for g in range(G):  # static unroll; all G weights are VMEM-resident
        xg = x[:, g * Cin:(g + 1) * Cin]                       # (TB, Cin)
        acc = jnp.dot(xg, w_ref[g], preferred_element_type=jnp.float32)
        o_ref[:, g * Coutp:(g + 1) * Coutp] = (acc + b_ref[g]).astype(o_ref.dtype)


# ----------------------------- wrappers ---------------------------------------


def _dense_tiles(M, N, K, itemsize):
    vmem = _vmem_capacity_bytes()
    big_vmem = vmem >= 100 * 1024 * 1024           # v5e/v6e (128 MiB) vs v7x (64 MiB)
    tm_cap = 1024 if big_vmem else 512
    budget = (20 if big_vmem else 12) * 1024 * 1024

    tn = min(512, _round_up(N, 128))
    tm = min(tm_cap, _round_up(M, 8))

    def footprint(tm_, tn_):
        # 2x: double-buffered pipelining of every operand + output tile.
        return 2 * itemsize * (tm_ * K + K * tn_ + tn_ + tm_ * tn_)

    while tm > 8 and footprint(tm, tn) > budget:
        tm = max(8, _round_up(tm // 2, 8))
    while tn > 128 and footprint(tm, tn) > budget:
        tn = max(128, _round_up(tn // 2, 128))
    return tm, tn


def _conv_dense(x, W, bias):
    B, C, K = x.shape
    N = W.shape[1]
    M = B * C
    dtype = x.dtype
    itemsize = jnp.dtype(dtype).itemsize

    tm, tn = _dense_tiles(M, N, K, itemsize)
    Mp = _round_up(M, tm)
    Np = _round_up(N, tn)

    x2 = x.reshape(M, K)                     # contiguous reshape: free
    if Mp != M:
        x2 = jnp.pad(x2, ((0, Mp - M), (0, 0)))
    W2 = W
    b2 = bias.reshape(1, N)
    if Np != N:
        W2 = jnp.pad(W2, ((0, 0), (0, Np - N)))
        b2 = jnp.pad(b2, ((0, 0), (0, Np - N)))

    out = pl.pallas_call(
        _dense_kernel,
        out_shape=jax.ShapeDtypeStruct((Mp, Np), dtype),
        grid=(Mp // tm, Np // tn),
        in_specs=[
            pl.BlockSpec((tm, K), lambda i, j: (i, 0)),
            pl.BlockSpec((K, tn), lambda i, j: (0, j)),
            pl.BlockSpec((1, tn), lambda i, j: (0, j)),
        ],
        out_specs=pl.BlockSpec((tm, tn), lambda i, j: (i, j)),
        compiler_params=pltpu.CompilerParams(
            dimension_semantics=("parallel", "parallel"),
            vmem_limit_bytes=_VMEM_LIMIT_BYTES,
        ),
        cost_estimate=pl.CostEstimate(
            flops=2 * M * K * N,
            transcendentals=0,
            bytes_accessed=(M * K + K * N + M * N) * itemsize,
        ),
    )(x2, W2, b2)

    if Mp != M or Np != N:
        out = out[:M, :N]
    return out.reshape(B, C, N)


def _conv_grouped(x, W, bias):
    B, G, Cin = x.shape
    Cout = W.shape[2]
    dtype = x.dtype
    itemsize = jnp.dtype(dtype).itemsize

    Coutp = _round_up(Cout, 128)             # lane-dense output stores

    vmem = _vmem_capacity_bytes()
    budget = (20 if vmem >= 100 * 1024 * 1024 else 12) * 1024 * 1024
    tb = min(512, _round_up(B, 8))

    def footprint(tb_):
        # double-buffered x/out tiles + resident (double-buffered) weights & bias
        return 2 * itemsize * (tb_ * G * Cin + G * Cin * Coutp + G * Coutp + tb_ * G * Coutp)

    while tb > 8 and footprint(tb) > budget:
        tb = max(8, _round_up(tb // 2, 8))
    Bp = _round_up(B, tb)

    # Contiguous reshape only (no jnp.transpose -> no extra HBM passes).
    x2 = x.reshape(B, G * Cin)
    if Bp != B:
        x2 = jnp.pad(x2, ((0, Bp - B), (0, 0)))
    Wp = W
    bp = bias.reshape(G, 1, Cout)
    if Coutp != Cout:
        Wp = jnp.pad(W, ((0, 0), (0, 0), (0, Coutp - Cout)))
        bp = jnp.pad(bp, ((0, 0), (0, 0), (0, Coutp - Cout)))

    out = pl.pallas_call(
        _grouped_kernel,
        out_shape=jax.ShapeDtypeStruct((Bp, G * Coutp), dtype),
        grid=(Bp // tb,),
        in_specs=[
            pl.BlockSpec((tb, G * Cin), lambda i: (i, 0)),
            pl.BlockSpec((G, Cin, Coutp), lambda i: (0, 0, 0)),   # grid-invariant: no re-DMA
            pl.BlockSpec((G, 1, Coutp), lambda i: (0, 0, 0)),
        ],
        out_specs=pl.BlockSpec((tb, G * Coutp), lambda i: (i, 0)),
        compiler_params=pltpu.CompilerParams(
            dimension_semantics=("parallel",),
            vmem_limit_bytes=_VMEM_LIMIT_BYTES,
        ),
        cost_estimate=pl.CostEstimate(
            flops=2 * B * G * Cin * Cout,
            transcendentals=0,
            bytes_accessed=(B * G * Cin + G * Cin * Cout + B * G * Cout) * itemsize,
        ),
    )(x2, Wp, bp)

    out = out[:B].reshape(B, G, Coutp)
    if Coutp != Cout:
        out = out[:, :, :Cout]
    return out


def conv1d1x1(x, W, bias, groups):
    """Pallas implementation of Conv1d1x1.forward (channel-first)."""
    if bias is None:
        if groups == 1:
            bias = jnp.zeros((1, W.shape[1]), dtype=x.dtype)
        else:
            bias = jnp.zeros((W.shape[0], W.shape[2]), dtype=x.dtype)
    if groups == 1:
        return _conv_dense(x, W, bias)
    assert x.shape[1] == groups, "channel-first grouped einsum requires x.shape[1] == groups"
    return _conv_grouped(x, W, bias)


if __name__ == "__main__":
    key = jax.random.PRNGKey(0)
    k1, k2, k3, k4 = jax.random.split(key, 4)

    cin, cout = 16, 32
    B = 2

    # --- groups == 1 case: W ~ randn(cin, cout), bias = zeros(1, cout) ---
    C = 8
    x_dense = jax.random.normal(k1, (B, C, cin), dtype=jnp.float32)
    W_dense = jax.random.normal(k2, (cin, cout), dtype=jnp.float32)
    b_dense = jnp.zeros((1, cout), dtype=jnp.float32)

    out_dense = jax.block_until_ready(conv1d1x1(x_dense, W_dense, b_dense, groups=1))
    ref_dense = jnp.einsum('bcm,mn->bcn', x_dense, W_dense) + b_dense

    # --- groups > 1 case: W ~ randn(groups, cin, cout), bias = zeros(groups, cout) ---
    G = 4
    x_grp = jax.random.normal(k3, (B, G, cin), dtype=jnp.float32)
    W_grp = jax.random.normal(k4, (G, cin, cout), dtype=jnp.float32)
    b_grp = jnp.zeros((G, cout), dtype=jnp.float32)

    out_grp = jax.block_until_ready(conv1d1x1(x_grp, W_grp, b_grp, groups=G))
    ref_grp = jnp.einsum('bcm,cmn->bcn', x_grp, W_grp) + b_grp

    assert out_dense.shape == (B, C, cout)
    assert out_grp.shape == (B, G, cout)
    assert jnp.allclose(out_dense, ref_dense, atol=1e-5, rtol=1e-5)
    assert jnp.allclose(out_grp, ref_grp, atol=1e-5, rtol=1e-5)

    print("KERNEL_OK")
</pallas_src>

<mosaic_0001>
module attributes {stable_mosaic.version = 11 : i64} {
  func.func @_dense_kernel(%arg0: i32, %arg1: i32, %arg2: memref<16x16xf32, #tpu.memory_space<vmem>>, %arg3: memref<16x128xf32, #tpu.memory_space<vmem>>, %arg4: memref<1x128xf32, #tpu.memory_space<vmem>>, %arg5: memref<16x128xf32, #tpu.memory_space<vmem>>) attributes {dimension_semantics = [#tpu.dimension_semantics<parallel>, #tpu.dimension_semantics<parallel>], iteration_bounds = array<i64: 1, 1>, scalar_prefetch = 0 : i64, scratch_operands = 0 : i64, tpu.core_type = #tpu.core_type<tc>, window_params = [{transform_indices = @transform_0, window_bounds = array<i64: 16, 16>}, {transform_indices = @transform_1, window_bounds = array<i64: 16, 128>}, {transform_indices = @transform_2, window_bounds = array<i64: 1, 128>}, {transform_indices = @transform_3, window_bounds = array<i64: 16, 128>}]} {
    %c0 = arith.constant 0 : index
    %c0_0 = arith.constant 0 : index
    %0 = vector.load %arg2[%c0, %c0_0] : memref<16x16xf32, #tpu.memory_space<vmem>>, vector<16x16xf32>
    %c0_1 = arith.constant 0 : index
    %c0_2 = arith.constant 0 : index
    %1 = vector.load %arg3[%c0_1, %c0_2] : memref<16x128xf32, #tpu.memory_space<vmem>>, vector<16x128xf32>
    %cst = arith.constant dense<0.000000e+00> : vector<16x128xf32>
    %2 = tpu.matmul %0, %1, %cst {dimension_numbers = #tpu.dot_dimension_numbers<[1], [0], [0], [1], [0, 0, 1, 1], [], []>} : vector<16x16xf32>, vector<16x128xf32>, vector<16x128xf32> -> vector<16x128xf32>
    %c0_3 = arith.constant 0 : index
    %c0_4 = arith.constant 0 : index
    %3 = vector.load %arg4[%c0_3, %c0_4] : memref<1x128xf32, #tpu.memory_space<vmem>>, vector<1x128xf32>
    %4 = vector.broadcast %3 : vector<1x128xf32> to vector<16x128xf32>
    %5 = arith.addf %2, %4 : vector<16x128xf32>
    %c0_5 = arith.constant 0 : index
    %c0_6 = arith.constant 0 : index
    %6 = vector.load %arg5[%c0_5, %c0_6] : memref<16x128xf32, #tpu.memory_space<vmem>>, vector<16x128xf32>
    tpu.vector_store %arg5[%c0_5, %c0_6], %5 {strides = array<i32>} : memref<16x128xf32, #tpu.memory_space<vmem>>, vector<16x128xf32>,
    return
  }
  func.func @transform_0(%arg0: i32, %arg1: i32) -> (i32, i32) {
    %c0_i32 = arith.constant 0 : i32
    %c0_i32_0 = arith.constant 0 : i32
    return %arg0, %c0_i32 : i32, i32
  }
  func.func @transform_1(%arg0: i32, %arg1: i32) -> (i32, i32) {
    %c0_i32 = arith.constant 0 : i32
    %c0_i32_0 = arith.constant 0 : i32
    return %c0_i32, %arg1 : i32, i32
  }
  func.func @transform_2(%arg0: i32, %arg1: i32) -> (i32, i32) {
    %c0_i32 = arith.constant 0 : i32
    %c0_i32_0 = arith.constant 0 : i32
    return %c0_i32, %arg1 : i32, i32
  }
  func.func @transform_3(%arg0: i32, %arg1: i32) -> (i32, i32) {
    %c0_i32 = arith.constant 0 : i32
    return %arg0, %arg1 : i32, i32
  }
}

</mosaic_0001>

<llo_original>
// kernel: tpu_custom_call.1
$region0: #{tpu_custom_call.1}
  #allocation0 [shape = 'u32[]', space=smem, size = 0x4, offset = 0x4, fixed_abs, tag = 'smem constant byte address 0x4 - core index']
  #allocation1 [shape = 'u32[144,128]{1,0:T(1,128)}', space=vmem, size = 0x12000, scoped, tag = 'internal scratch']
  %s0 = inlined_call_operand.hbm [shape: f32[16,16], index: 0, kind: input, shape index: {}]
  %s1 = inlined_call_operand.hbm [shape: f32[16,128], index: 1, kind: input, shape index: {}]
  %s2 = inlined_call_operand.vmem [shape: f32[1,128], index: 2, kind: input, shape index: {}]
  %s3 = inlined_call_operand.hbm [shape: f32[16,128], index: 3, kind: output, shape index: {}]
  %s4 = sld [smem:[#allocation0]]
  $region30: #{tpu_custom_call.1} parent=0
    _
  %s6 = ssub.s32 1, %s4
  %s7 = scalar_select 0, %s6, %s4
  $region1: #{tpu_custom_call.1} parent=0
    #allocation2 [shape = 'u8[8192]{0}', space=vmem, size = 0x2000, scoped, tag = 'input window, operand 0, single buffered']
    #allocation3 [shape = 's32[1]{0}', space=sflag, size = 0x4, scoped, tag = 'scoped memory for tpu_custom_call.1']
    #allocation4 [shape = 's32[1]{0}', space=sflag, size = 0x4, scoped, tag = 'scoped memory for tpu_custom_call.1']
    #allocation5 [shape = 'u8[8192]{0}', space=vmem, size = 0x2000, scoped, tag = 'input window, operand 1, single buffered']
    #allocation6 [shape = 's32[1]{0}', space=sflag, size = 0x4, scoped, tag = 'scoped memory for tpu_custom_call.1']
    #allocation7 [shape = 'u8[8192]{0}', space=vmem, size = 0x2000, scoped, tag = 'output window, operand 0, single buffered']
    %8 = vsyncpa [#allocation3], 0
    %9 = vsyncpa [#allocation6], 0
    %10 = vsyncpa [#allocation4], 0
    // Predicated region
    $region2: #{tpu_custom_call.1} parent=1 // pred_check
      _
    $region3: #{tpu_custom_call.1} parent=1 // pred_check_branch
      %12 = sbr.rel (0) target = $region5
    $region4: #{tpu_custom_call.1} parent=1 // pred_region
      %s14 = ssub.s32 256, 256
      %15 = vsyncadd [#allocation3], %s14
      %s16 = sshll.u32 [#allocation2], 4
      %s17 = int_to_ptr.vmem [resolvable:$true] %s16
      %22 = dma.hbm_to_vmem [thread:$0]  %s0, 256, %s17, [#allocation3], 128, 128, 8
    $region5: #{tpu_custom_call.1} parent=1 // pred_fallthru
      _
    // Predicated region
    $region6: #{tpu_custom_call.1} parent=1 // pred_check
      _
    $region7: #{tpu_custom_call.1} parent=1 // pred_check_branch
      %24 = sbr.rel (0) target = $region9
    $region8: #{tpu_custom_call.1} parent=1 // pred_region
      %s26 = ssub.s32 256, 256
      %27 = vsyncadd [#allocation6], %s26
      %s28 = sshll.u32 [#allocation5], 4
      %s29 = int_to_ptr.vmem [resolvable:$true] %s28
      %34 = dma.hbm_to_vmem [thread:$0]  %s1, 256, %s29, [#allocation6], 128, 128, 8
    $region9: #{tpu_custom_call.1} parent=1 // pred_fallthru
      _
    // Predicated region
    $region10: #{tpu_custom_call.1} parent=1 // pred_check
      _
    $region11: #{tpu_custom_call.1} parent=1 // pred_check_branch
      %36 = sbr.rel (0) target = $region13
    $region12: #{tpu_custom_call.1} parent=1 // pred_region
      _
    $region13: #{tpu_custom_call.1} parent=1 // pred_fallthru
      _
    // Predicated region
    $region14: #{tpu_custom_call.1} parent=1 // pred_check
      _
    $region15: #{tpu_custom_call.1} parent=1 // pred_check_branch
      %38 = sbr.rel (0) target = $region17
    $region16: #{tpu_custom_call.1} parent=1 // pred_region
      %39 = dma.done [#allocation3], 256
    $region17: #{tpu_custom_call.1} parent=1 // pred_fallthru
      _
    // Predicated region
    $region18: #{tpu_custom_call.1} parent=1 // pred_check
      _
    $region19: #{tpu_custom_call.1} parent=1 // pred_check_branch
      %41 = sbr.rel (0) target = $region21
    $region20: #{tpu_custom_call.1} parent=1 // pred_region
      %42 = dma.done [#allocation6], 256
    $region21: #{tpu_custom_call.1} parent=1 // pred_fallthru
      _
    %v43 = vld [vmem:[#allocation2] sm:$0xff]
    %v44 = vld [vmem:[#allocation2 + $0x8] sm:$0xff]
    %v45 = vld [vmem:[#allocation5] sm:$0xff]
    %v46 = vld [vmem:[#allocation5 + $0x8] sm:$0xff]
    %v47 = vld [vmem:[%s2] sm:$0x1]
    %v49 = vlaneseq
    %v50 = vshrl.u32 %v49, 7
    %v51 = vsub.s32 0, %v50
    %v52 = vrot.slane %v47, %v51
    %vm54 = vcmask 130048
    %v56 = vsel %vm54, %v43, 0
    %v59 = vsel %vm54, %v44, 0
    %61 = vmatprep.subr.mxu0 0.0
    %62 = vmatpush1.msra.mxu0 %v45
    %63 = vmatprep.subr.mxu0 0.0
    %64 = vmatpush1.msra.mxu0 %v46
    %65 = vmatprep.subr.mxu0 0.0
    %66 = vmatpush1.msra.mxu0 0.0
    %67 = vmatprep.subr.mxu0 0.0
    %68 = vmatpush1.msra.mxu0 0.0
    %69 = vmatprep.subr.mxu0 0.0
    %70 = vmatpush1.msra.mxu0 0.0
    %71 = vmatprep.subr.mxu0 0.0
    %72 = vmatpush1.msra.mxu0 0.0
    %73 = vmatprep.subr.mxu0 0.0
    %74 = vmatpush1.msra.mxu0 0.0
    %75 = vmatprep.subr.mxu0 0.0
    %76 = vmatpush1.msra.mxu0 0.0
    %77 = vmatprep.subr.mxu0 0.0
    %78 = vmatpush1.msra.mxu0 0.0
    %79 = vmatprep.subr.mxu0 0.0
    %80 = vmatpush1.msra.mxu0 0.0
    %81 = vmatprep.subr.mxu0 0.0
    %82 = vmatpush1.msra.mxu0 0.0
    %83 = vmatprep.subr.mxu0 0.0
    %84 = vmatpush1.msra.mxu0 0.0
    %85 = vmatprep.subr.mxu0 0.0
    %86 = vmatpush1.msra.mxu0 0.0
    %87 = vmatprep.subr.mxu0 0.0
    %88 = vmatpush1.msra.mxu0 0.0
    %89 = vmatprep.subr.mxu0 0.0
    %90 = vmatpush1.msra.mxu0 0.0
    %91 = vmatprep.subr.mxu0 0.0
    %92 = vmatpush1.msra.mxu0 0.0
    %93 = vmatprep.subr.mxu0 0.0
    %94 = vmatpush1.msra.mxu0 0.0
    %95 = vmatprep.subr.mxu0 0.0
    %96 = vmatpush1.msra.mxu0 0.0
    %97 = vmatprep.subr.mxu0 0.0
    %98 = vmatpush1.msra.mxu0 0.0
    %99 = vmatprep.subr.mxu0 0.0
    %100 = vmatpush1.msra.mxu0 0.0
    %101 = vmatprep.subr.mxu0 0.0
    %102 = vmatpush1.msra.mxu0 0.0
    %103 = vmatprep.subr.mxu0 0.0
    %104 = vmatpush1.msra.mxu0 0.0
    %105 = vmatprep.subr.mxu0 0.0
    %106 = vmatpush1.msra.mxu0 0.0
    %107 = vmatprep.subr.mxu0 0.0
    %108 = vmatpush1.msra.mxu0 0.0
    %109 = vmatprep.subr.mxu0 0.0
    %110 = vmatpush1.msra.mxu0 0.0
    %111 = vmatprep.subr.mxu0 0.0
    %112 = vmatpush1.msra.mxu0 0.0
    %113 = vmatprep.subr.mxu0 0.0
    %114 = vmatpush1.msra.mxu0 0.0
    %115 = vmatprep.subr.mxu0 0.0
    %116 = vmatpush1.msra.mxu0 0.0
    %117 = vmatprep.subr.mxu0 0.0
    %118 = vmatpush1.msra.mxu0 0.0
    %119 = vmatprep.subr.mxu0 0.0
    %120 = vmatpush1.msra.mxu0 0.0
    %121 = vmatprep.subr.mxu0 0.0
    %122 = vmatpush1.msra.mxu0 0.0
    %123 = vmatprep.subr.mxu0 0.0
    %124 = vmatpush1.msra.mxu0 0.0
    %125 = vmatprep.mubr.f32.mxu0 0.0
    %126 = vmatmul.mubr.f32.gmra.mrb[0].mxu0 %v56
    %v127 = vpop.f32.mrb[0].mxu0
    %v128 = vadd.f32 %v52, %v127
    %v129 = vpop.f32.mrb[0].mxu0
    %130 = vmatprep.mubr.f32.mxu0 0.0
    %131 = vmatmul.mubr.f32.gmra.mrb[0].mxu0 %v59
    %v132 = vpop.f32.mrb[0].mxu0
    %v133 = vadd.f32 %v52, %v132
    %v134 = vpop.f32.mrb[0].mxu0
    %135 = vdwg.mxu0
    %136 = vst [vmem:[#allocation7] sm:$0xff] %v128
    %137 = vst [vmem:[#allocation7 + $0x8] sm:$0xff] %v133
    // Predicated region
    $region22: #{tpu_custom_call.1} parent=1 // pred_check
      _
    $region23: #{tpu_custom_call.1} parent=1 // pred_check_branch
      %139 = sbr.rel (0) target = $region25
    $region24: #{tpu_custom_call.1} parent=1 // pred_region
      %s141 = ssub.s32 256, 256
      %142 = vsyncadd [#allocation4], %s141
      %s143 = sshll.u32 [#allocation7], 4
      %s144 = int_to_ptr.vmem [resolvable:$true] %s143
      %149 = dma.vmem_to_hbm [thread:$0]  %s144, 256, %s3, [#allocation4], 128, 128, 8
    $region25: #{tpu_custom_call.1} parent=1 // pred_fallthru
      _
    // Predicated region
    $region26: #{tpu_custom_call.1} parent=1 // pred_check
      _
    $region27: #{tpu_custom_call.1} parent=1 // pred_check_branch
      %151 = sbr.rel (0) target = $region29
    $region28: #{tpu_custom_call.1} parent=1 // pred_region
      %152 = dma.done [#allocation4], 256
    $region29: #{tpu_custom_call.1} parent=1 // pred_fallthru
      _
    %153 = vsyncpa [#allocation3], 1
    %154 = vsyncpa [#allocation6], 1
    %155 = vsyncpa [#allocation4], 1

</llo_original>
